<compile_context>
chip_gen: v7x
topology: tpu7x:2x2x1
jax: 0.10.0
libtpu: 0.0.40
codegen_flags: <defaults>
</compile_context>

<pallas_src>
import functools

import jax
import jax.numpy as jnp
from jax import lax
from jax.experimental import pallas as pl
from jax.experimental.pallas import tpu as pltpu


def _round_up(x, m):
    return (x + m - 1) // m * m


def _vmem_limit_bytes():
    """Generation-aware VMEM budget with headroom for compiler scratch."""
    try:
        cap = pltpu.get_tpu_info().vmem_capacity_bytes
    except Exception:
        cap = 64 * 1024 * 1024  # assume the smallest (v7x) if the query fails
    return min(int(cap * 3 // 4), 100 * 1024 * 1024)


def _const_spec(shape, single_buffered):
    """BlockSpec for a grid-invariant operand (weights / biases)."""
    index_map = lambda n, t: (0,) * len(shape)
    if single_buffered:
        # Constant across the grid -> single buffer (halves weight VMEM and
        # drops the redundant per-step DMA descriptors).
        return pl.BlockSpec(shape, index_map, pipeline_mode=pl.Buffered(1))
    return pl.BlockSpec(shape, index_map)


def _centernet_head_kernel(p_ref, w1_ref, b1_ref, w2_ref, b2_ref, o_ref):
    """One (batch, HW-tile) grid step, fully lane-dense (HW on lanes).

    p_ref : (1, 9*Cin, tHW)  im2col patches tile (compute dtype)
    w1_ref: (Ch, 9*Cin)      conv1 weights, columns ordered (dy, dx, cin)
    b1_ref: (Ch, 1)          conv1 bias (f32)
    w2_ref: (Cls, Ch)        conv2 (1x1) weights
    b2_ref: (Cls, 1)         conv2 bias (f32)
    o_ref : (1, Cls, tHW)    lane-dense output tile (f32)
    """
    patches = p_ref[0]                                        # (9*Cin, tHW)

    # conv1 (3x3) directly in (Ch, HW) form: one fat-K MXU matmul with f32
    # accumulation; bias + ReLU fused in the f32 epilogue. No transposes.
    hidden = jnp.dot(w1_ref[...], patches,
                     preferred_element_type=jnp.float32)      # (Ch, tHW) f32
    hidden = jnp.maximum(hidden + b1_ref[...], 0.0)

    # conv2 (1x1): (Cls, Ch) @ (Ch, tHW) -> (Cls, tHW); lane-dense store.
    out = jnp.dot(w2_ref[...], hidden.astype(w2_ref.dtype),
                  preferred_element_type=jnp.float32)
    o_ref[0] = (out + b2_ref[...]).astype(o_ref.dtype)


def centernet_head(x_nchw, w1, b1, w2, b2, *,
                   compute_dtype=jnp.float32,
                   tile_hw=512,
                   single_buffer_weights=True):
    """Pallas implementation of CenterNetHead.forward.

    x_nchw: (N, Cin, H, W) f32
    w1:     (Ch, Cin, 3, 3) PyTorch OIHW conv1 weight,  b1: (Ch,)
    w2:     (Cls, Ch, 1, 1) PyTorch OIHW conv2 weight,  b2: (Cls,)
    compute_dtype: dtype of the matmul operands (f32 or bf16); accumulation
                   is always f32.  All casts happen in the wrapper (important
                   for v5e, whose VPU has no bf16 ALUs).
    returns (N, Cls, H, W) f32
    """
    N, Cin, H, W = x_nchw.shape
    Ch = w1.shape[0]
    Cls = w2.shape[0]
    hw = H * W

    # Lane-dense spatial tiling: tiles are multiples of 128 lanes so the store
    # is always a full-width vst, and HW is zero-padded up to a whole number of
    # tiles (padded columns produce bias-only values that are sliced off).
    hw_128 = _round_up(hw, 128)
    tile = min(_round_up(tile_hw, 128), hw_128)
    hw_pad = _round_up(hw, tile)
    num_tiles = hw_pad // tile

    # im2col in the wrapper (XLA), kept channel-major so HW stays on lanes:
    #   patches[n, (dy*3+dx)*Cin + cin, h*W + w] = x_pad[n, cin, h+dy, w+dx]
    x_pad = jnp.pad(x_nchw, ((0, 0), (0, 0), (1, 1), (1, 1)))
    taps = [x_pad[:, :, dy:dy + H, dx:dx + W].reshape(N, Cin, hw)
            for dy in range(3) for dx in range(3)]
    patches = jnp.concatenate(taps, axis=1)                   # (N, 9*Cin, HW)
    patches = jnp.pad(patches, ((0, 0), (0, 0), (0, hw_pad - hw)))
    patches = patches.astype(compute_dtype)

    # conv1 weights flattened to match the patch-row ordering (dy, dx, cin).
    w1_mat = jnp.transpose(w1, (0, 2, 3, 1)).reshape(Ch, 9 * Cin).astype(compute_dtype)
    w2_mat = w2.reshape(Cls, Ch).astype(compute_dtype)
    b1_col = b1.reshape(Ch, 1).astype(jnp.float32)
    b2_col = b2.reshape(Cls, 1).astype(jnp.float32)

    out_flat = pl.pallas_call(
        _centernet_head_kernel,
        out_shape=jax.ShapeDtypeStruct((N, Cls, hw_pad), jnp.float32),
        grid_spec=pltpu.PrefetchScalarGridSpec(
            num_scalar_prefetch=0,
            grid=(N, num_tiles),
            in_specs=[
                pl.BlockSpec((1, 9 * Cin, tile), lambda n, t: (n, 0, t)),
                _const_spec((Ch, 9 * Cin), single_buffer_weights),
                _const_spec((Ch, 1), single_buffer_weights),
                _const_spec((Cls, Ch), single_buffer_weights),
                _const_spec((Cls, 1), single_buffer_weights),
            ],
            out_specs=pl.BlockSpec((1, Cls, tile), lambda n, t: (n, 0, t)),
        ),
        compiler_params=pltpu.CompilerParams(
            dimension_semantics=("parallel", "parallel"),
            vmem_limit_bytes=_vmem_limit_bytes(),
        ),
    )(patches, w1_mat, b1_col, w2_mat, b2_col)

    if hw_pad != hw:
        out_flat = out_flat[:, :, :hw]
    # Free metadata reshape; no NCHW<->NHWC transpose anywhere in the pipeline.
    return out_flat.reshape(N, Cls, H, W)


def _reference(x_nchw, w1, b1, w2, b2):
    """Pure-JAX reference mirroring the PyTorch forward (NCHW convs)."""
    dn = ("NCHW", "OIHW", "NCHW")
    y = lax.conv_general_dilated(x_nchw, w1, window_strides=(1, 1),
                                 padding=((1, 1), (1, 1)),
                                 dimension_numbers=dn)
    y = y + b1.reshape(1, -1, 1, 1)
    y = jnp.maximum(y, 0.0)
    y = lax.conv_general_dilated(y, w2, window_strides=(1, 1),
                                 padding=((0, 0), (0, 0)),
                                 dimension_numbers=dn)
    y = y + b2.reshape(1, -1, 1, 1)
    return y


if __name__ == "__main__":
    # Small shapes: batch=2, in_channels=4, head_conv=32, classes=8, spatial=16
    N, Cin, H, W = 2, 4, 16, 16
    head_conv, classes = 32, 8

    key = jax.random.PRNGKey(0)
    kx, k1, kb1, k2, kb2 = jax.random.split(key, 5)

    x = jax.random.normal(kx, (N, Cin, H, W), dtype=jnp.float32)
    w1 = jax.random.normal(k1, (head_conv, Cin, 3, 3), dtype=jnp.float32) * 0.1
    b1 = jax.random.normal(kb1, (head_conv,), dtype=jnp.float32) * 0.1
    w2 = jax.random.normal(k2, (classes, head_conv, 1, 1), dtype=jnp.float32) * 0.1
    b2 = jax.random.normal(kb2, (classes,), dtype=jnp.float32) * 0.1

    ref = _reference(x, w1, b1, w2, b2)

    def _run(compute_dtype):
        try:
            fn = jax.jit(functools.partial(centernet_head,
                                           compute_dtype=compute_dtype))
            return jax.block_until_ready(fn(x, w1, b1, w2, b2))
        except Exception:
            # Version-compat fallback: jax builds without BlockSpec(pipeline_mode=...).
            fn = jax.jit(functools.partial(centernet_head,
                                           compute_dtype=compute_dtype,
                                           single_buffer_weights=False))
            return jax.block_until_ready(fn(x, w1, b1, w2, b2))

    # f32 path: exact semantics of the PyTorch module.
    out = _run(jnp.float32)
    assert out.shape == (N, classes, H, W), out.shape
    assert jnp.allclose(out, ref, atol=1e-4, rtol=1e-4), \
        float(jnp.max(jnp.abs(out - ref)))

    # bf16 matmul-operand path (f32 accumulation): MXU-native on v6e/v7x.
    out_bf16 = _run(jnp.bfloat16)
    assert out_bf16.shape == (N, classes, H, W), out_bf16.shape
    assert jnp.allclose(out_bf16, ref, atol=5e-2, rtol=5e-2), \
        float(jnp.max(jnp.abs(out_bf16 - ref)))

    print("KERNEL_OK")
</pallas_src>

<mosaic_0001>
module attributes {stable_mosaic.version = 11 : i64} {
  func.func @_centernet_head_kernel(%arg0: i32, %arg1: i32, %arg2: memref<1x36x256xf32, #tpu.memory_space<vmem>>, %arg3: memref<32x36xf32, #tpu.memory_space<vmem>>, %arg4: memref<32x1xf32, #tpu.memory_space<vmem>>, %arg5: memref<8x32xf32, #tpu.memory_space<vmem>>, %arg6: memref<8x1xf32, #tpu.memory_space<vmem>>, %arg7: memref<1x8x256xf32, #tpu.memory_space<vmem>>) attributes {dimension_semantics = [#tpu.dimension_semantics<parallel>, #tpu.dimension_semantics<parallel>], iteration_bounds = array<i64: 2, 1>, scalar_prefetch = 0 : i64, scratch_operands = 0 : i64, tpu.core_type = #tpu.core_type<tc>, window_params = [{transform_indices = @transform_0, window_bounds = array<i64: 1, 36, 256>}, {pipeline_mode = #tpu.pipeline_mode<synchronous>, transform_indices = @transform_1, window_bounds = array<i64: 32, 36>}, {pipeline_mode = #tpu.pipeline_mode<synchronous>, transform_indices = @transform_2, window_bounds = array<i64: 32, 1>}, {pipeline_mode = #tpu.pipeline_mode<synchronous>, transform_indices = @transform_3, window_bounds = array<i64: 8, 32>}, {pipeline_mode = #tpu.pipeline_mode<synchronous>, transform_indices = @transform_4, window_bounds = array<i64: 8, 1>}, {transform_indices = @transform_5, window_bounds = array<i64: 1, 8, 256>}]} {
    %c0 = arith.constant 0 : index
    %c0_0 = arith.constant 0 : index
    %c0_1 = arith.constant 0 : index
    %0 = vector.load %arg2[%c0, %c0_0, %c0_1] : memref<1x36x256xf32, #tpu.memory_space<vmem>>, vector<1x36x256xf32>
    %1 = vector.shape_cast %0 : vector<1x36x256xf32> to vector<36x256xf32>
    %c0_2 = arith.constant 0 : index
    %c0_3 = arith.constant 0 : index
    %2 = vector.load %arg3[%c0_2, %c0_3] : memref<32x36xf32, #tpu.memory_space<vmem>>, vector<32x36xf32>
    %cst = arith.constant dense<0.000000e+00> : vector<32x256xf32>
    %3 = tpu.matmul %2, %1, %cst {dimension_numbers = #tpu.dot_dimension_numbers<[1], [0], [0], [1], [0, 0, 1, 1], [], []>} : vector<32x36xf32>, vector<36x256xf32>, vector<32x256xf32> -> vector<32x256xf32>
    %c0_4 = arith.constant 0 : index
    %c0_5 = arith.constant 0 : index
    %4 = vector.load %arg4[%c0_4, %c0_5] : memref<32x1xf32, #tpu.memory_space<vmem>>, vector<32x1xf32>
    %5 = vector.broadcast %4 : vector<32x1xf32> to vector<32x256xf32>
    %6 = arith.addf %3, %5 : vector<32x256xf32>
    %cst_6 = arith.constant 0.000000e+00 : f32
    %7 = vector.broadcast %cst_6 : f32 to vector<32x256xf32>
    %8 = arith.maximumf %6, %7 : vector<32x256xf32>
    %c0_7 = arith.constant 0 : index
    %c0_8 = arith.constant 0 : index
    %9 = vector.load %arg5[%c0_7, %c0_8] : memref<8x32xf32, #tpu.memory_space<vmem>>, vector<8x32xf32>
    %cst_9 = arith.constant dense<0.000000e+00> : vector<8x256xf32>
    %10 = tpu.matmul %9, %8, %cst_9 {dimension_numbers = #tpu.dot_dimension_numbers<[1], [0], [0], [1], [0, 0, 1, 1], [], []>} : vector<8x32xf32>, vector<32x256xf32>, vector<8x256xf32> -> vector<8x256xf32>
    %c0_10 = arith.constant 0 : index
    %c0_11 = arith.constant 0 : index
    %11 = vector.load %arg6[%c0_10, %c0_11] : memref<8x1xf32, #tpu.memory_space<vmem>>, vector<8x1xf32>
    %12 = vector.broadcast %11 : vector<8x1xf32> to vector<8x256xf32>
    %13 = arith.addf %10, %12 : vector<8x256xf32>
    %c0_12 = arith.constant 0 : index
    %c0_13 = arith.constant 0 : index
    %c0_14 = arith.constant 0 : index
    %14 = vector.load %arg7[%c0_12, %c0_13, %c0_14] : memref<1x8x256xf32, #tpu.memory_space<vmem>>, vector<1x8x256xf32>
    %15 = vector.shape_cast %14 : vector<1x8x256xf32> to vector<8x256xf32>
    %16 = vector.shape_cast %13 : vector<8x256xf32> to vector<1x8x256xf32>
    tpu.vector_store %arg7[%c0_12, %c0_13, %c0_14], %16 {strides = array<i32>} : memref<1x8x256xf32, #tpu.memory_space<vmem>>, vector<1x8x256xf32>,
    return
  }
  func.func @transform_0(%arg0: i32, %arg1: i32) -> (i32, i32, i32) {
    %c0_i32 = arith.constant 0 : i32
    %c0_i32_0 = arith.constant 0 : i32
    return %arg0, %c0_i32, %arg1 : i32, i32, i32
  }
  func.func @transform_1(%arg0: i32, %arg1: i32) -> (i32, i32) {
    %c0_i32 = arith.constant 0 : i32
    %c0_i32_0 = arith.constant 0 : i32
    %c0_i32_1 = arith.constant 0 : i32
    return %c0_i32, %c0_i32_0 : i32, i32
  }
  func.func @transform_2(%arg0: i32, %arg1: i32) -> (i32, i32) {
    %c0_i32 = arith.constant 0 : i32
    %c0_i32_0 = arith.constant 0 : i32
    %c0_i32_1 = arith.constant 0 : i32
    return %c0_i32, %c0_i32_0 : i32, i32
  }
  func.func @transform_3(%arg0: i32, %arg1: i32) -> (i32, i32) {
    %c0_i32 = arith.constant 0 : i32
    %c0_i32_0 = arith.constant 0 : i32
    %c0_i32_1 = arith.constant 0 : i32
    return %c0_i32, %c0_i32_0 : i32, i32
  }
  func.func @transform_4(%arg0: i32, %arg1: i32) -> (i32, i32) {
    %c0_i32 = arith.constant 0 : i32
    %c0_i32_0 = arith.constant 0 : i32
    %c0_i32_1 = arith.constant 0 : i32
    return %c0_i32, %c0_i32_0 : i32, i32
  }
  func.func @transform_5(%arg0: i32, %arg1: i32) -> (i32, i32, i32) {
    %c0_i32 = arith.constant 0 : i32
    %c0_i32_0 = arith.constant 0 : i32
    return %arg0, %c0_i32, %arg1 : i32, i32, i32
  }
}

module attributes {stable_mosaic.version = 11 : i64} {
  func.func @_centernet_head_kernel(%arg0: i32, %arg1: i32, %arg2: memref<1x36x256xf32, #tpu.memory_space<vmem>>, %arg3: memref<32x36xf32, #tpu.memory_space<vmem>>, %arg4: memref<32x1xf32, #tpu.memory_space<vmem>>, %arg5: memref<8x32xf32, #tpu.memory_space<vmem>>, %arg6: memref<8x1xf32, #tpu.memory_space<vmem>>, %arg7: memref<1x8x256xf32, #tpu.memory_space<vmem>>) attributes {dimension_semantics = [#tpu.dimension_semantics<parallel>, #tpu.dimension_semantics<parallel>], iteration_bounds = array<i64: 2, 1>, scalar_prefetch = 0 : i64, scratch_operands = 0 : i64, tpu.core_type = #tpu.core_type<tc>, window_params = [{transform_indices = @transform_0, window_bounds = array<i64: 1, 36, 256>}, {pipeline_mode = #tpu.pipeline_mode<synchronous>, transform_indices = @transform_1, window_bounds = array<i64: 32, 36>}, {pipeline_mode = #tpu.pipeline_mode<synchronous>, transform_indices = @transform_2, window_bounds = array<i64: 32, 1>}, {pipeline_mode = #tpu.pipeline_mode<synchronous>, transform_indices = @transform_3, window_bounds = array<i64: 8, 32>}, {pipeline_mode = #tpu.pipeline_mode<synchronous>, transform_indices = @transform_4, window_bounds = array<i64: 8, 1>}, {transform_indices = @transform_5, window_bounds = array<i64: 1, 8, 256>}]} {
    %c0 = arith.constant 0 : index
    %c0_0 = arith.constant 0 : index
    %c0_1 = arith.constant 0 : index
    %0 = vector.load %arg2[%c0, %c0_0, %c0_1] : memref<1x36x256xf32, #tpu.memory_space<vmem>>, vector<1x36x256xf32>
    %1 = vector.shape_cast %0 : vector<1x36x256xf32> to vector<36x256xf32>
    %c0_2 = arith.constant 0 : index
    %c0_3 = arith.constant 0 : index
    %2 = vector.load %arg3[%c0_2, %c0_3] : memref<32x36xf32, #tpu.memory_space<vmem>>, vector<32x36xf32>
    %cst = arith.constant dense<0.000000e+00> : vector<32x256xf32>
    %3 = tpu.matmul %2, %1, %cst {dimension_numbers = #tpu.dot_dimension_numbers<[1], [0], [0], [1], [0, 0, 1, 1], [], []>} : vector<32x36xf32>, vector<36x256xf32>, vector<32x256xf32> -> vector<32x256xf32>
    %c0_4 = arith.constant 0 : index
    %c0_5 = arith.constant 0 : index
    %4 = vector.load %arg4[%c0_4, %c0_5] : memref<32x1xf32, #tpu.memory_space<vmem>>, vector<32x1xf32>
    %5 = vector.broadcast %4 : vector<32x1xf32> to vector<32x256xf32>
    %6 = arith.addf %3, %5 : vector<32x256xf32>
    %cst_6 = arith.constant 0.000000e+00 : f32
    %7 = vector.broadcast %cst_6 : f32 to vector<32x256xf32>
    %8 = arith.maximumf %6, %7 : vector<32x256xf32>
    %c0_7 = arith.constant 0 : index
    %c0_8 = arith.constant 0 : index
    %9 = vector.load %arg5[%c0_7, %c0_8] : memref<8x32xf32, #tpu.memory_space<vmem>>, vector<8x32xf32>
    %cst_9 = arith.constant dense<0.000000e+00> : vector<8x256xf32>
    %10 = tpu.matmul %9, %8, %cst_9 {dimension_numbers = #tpu.dot_dimension_numbers<[1], [0], [0], [1], [0, 0, 1, 1], [], []>} : vector<8x32xf32>, vector<32x256xf32>, vector<8x256xf32> -> vector<8x256xf32>
    %c0_10 = arith.constant 0 : index
    %c0_11 = arith.constant 0 : index
    %11 = vector.load %arg6[%c0_10, %c0_11] : memref<8x1xf32, #tpu.memory_space<vmem>>, vector<8x1xf32>
    %12 = vector.broadcast %11 : vector<8x1xf32> to vector<8x256xf32>
    %13 = arith.addf %10, %12 : vector<8x256xf32>
    %c0_12 = arith.constant 0 : index
    %c0_13 = arith.constant 0 : index
    %c0_14 = arith.constant 0 : index
    %14 = vector.load %arg7[%c0_12, %c0_13, %c0_14] : memref<1x8x256xf32, #tpu.memory_space<vmem>>, vector<1x8x256xf32>
    %15 = vector.shape_cast %14 : vector<1x8x256xf32> to vector<8x256xf32>
    %16 = vector.shape_cast %13 : vector<8x256xf32> to vector<1x8x256xf32>
    tpu.vector_store %arg7[%c0_12, %c0_13, %c0_14], %16 {strides = array<i32>} : memref<1x8x256xf32, #tpu.memory_space<vmem>>, vector<1x8x256xf32>,
    return
  }
  func.func @transform_0(%arg0: i32, %arg1: i32) -> (i32, i32, i32) {
    %c0_i32 = arith.constant 0 : i32
    %c0_i32_0 = arith.constant 0 : i32
    return %arg0, %c0_i32, %arg1 : i32, i32, i32
  }
  func.func @transform_1(%arg0: i32, %arg1: i32) -> (i32, i32) {
    %c0_i32 = arith.constant 0 : i32
    %c0_i32_0 = arith.constant 0 : i32
    %c0_i32_1 = arith.constant 0 : i32
    return %c0_i32, %c0_i32_0 : i32, i32
  }
  func.func @transform_2(%arg0: i32, %arg1: i32) -> (i32, i32) {
    %c0_i32 = arith.constant 0 : i32
    %c0_i32_0 = arith.constant 0 : i32
    %c0_i32_1 = arith.constant 0 : i32
    return %c0_i32, %c0_i32_0 : i32, i32
  }
  func.func @transform_3(%arg0: i32, %arg1: i32) -> (i32, i32) {
    %c0_i32 = arith.constant 0 : i32
    %c0_i32_0 = arith.constant 0 : i32
    %c0_i32_1 = arith.constant 0 : i32
    return %c0_i32, %c0_i32_0 : i32, i32
  }
  func.func @transform_4(%arg0: i32, %arg1: i32) -> (i32, i32) {
    %c0_i32 = arith.constant 0 : i32
    %c0_i32_0 = arith.constant 0 : i32
    %c0_i32_1 = arith.constant 0 : i32
    return %c0_i32, %c0_i32_0 : i32, i32
  }
  func.func @transform_5(%arg0: i32, %arg1: i32) -> (i32, i32, i32) {
    %c0_i32 = arith.constant 0 : i32
    %c0_i32_0 = arith.constant 0 : i32
    return %arg0, %c0_i32, %arg1 : i32, i32, i32
  }
}

</mosaic_0001>

<llo_original>
// kernel: centernet_head.1
$region0: #{centernet_head.1}
  #allocation0 [shape = 'u32[]', space=smem, size = 0x4, offset = 0x4, fixed_abs, tag = 'smem constant byte address 0x4 - core index']
  #allocation1 [shape = 'u32[144,128]{1,0:T(1,128)}', space=vmem, size = 0x12000, scoped, tag = 'internal scratch']
  %s0 = inlined_call_operand.vmem [shape: f32[2,36,256], index: 0, kind: input, shape index: {}]
  %s1 = inlined_call_operand.vmem [shape: f32[32,36], index: 1, kind: input, shape index: {}]
  %s2 = inlined_call_operand.vmem [shape: f32[32,1], index: 2, kind: input, shape index: {}]
  %s3 = inlined_call_operand.vmem [shape: f32[8,32], index: 3, kind: input, shape index: {}]
  %s4 = inlined_call_operand.vmem [shape: f32[8,1], index: 4, kind: input, shape index: {}]
  %s5 = inlined_call_operand.vmem [shape: f32[2,8,256], index: 5, kind: output, shape index: {}]
  %s6 = sld [smem:[#allocation0]]
  $region53: #{centernet_head.1} parent=0
    _
  %s8 = ssub.s32 1, %s6
  %s9 = scalar_select 0, %s8, %s6
  loop: start=0, step=1, limit=4
  $region2: #{centernet_head.1} parent=0 // loop_pre_header
    _
  $region3: #{centernet_head.1} parent=0 // loop_header
    %s11 = sphi 0, %s15
    %p12 = scmp.ge.s32.totalorder %s11, 4
    %s18 = sphi 0, %s30
    %s19 = sphi 0, %s26
    %s20 = sphi 0, %s18
    %s21 = sphi 0, %s19
    %s22 = sphi 0, %s20
    %s23 = sphi 0, %s21
    %s35 = sphi 0, %s37
    %s38 = sphi 0, %s35
    %s39 = sphi 0, %s38
    %s55 = sphi 0, %s39
    %s59 = sphi 0, %s59
    %s61 = sphi 0, %s59
    %s62 = sphi 0, %s61
    %s76 = sphi 0, %s62
    %s80 = sphi 0, %s80
    %s82 = sphi 0, %s80
    %s83 = sphi 0, %s82
    %s97 = sphi 0, %s83
    %s101 = sphi 0, %s101
    %s103 = sphi 0, %s101
    %s104 = sphi 0, %s103
    %s118 = sphi 0, %s104
    %s122 = sphi 0, %s122
    %s124 = sphi 0, %s122
    %s125 = sphi 0, %s124
    %s139 = sphi 0, %s125
    %s147 = sphi 0, %s149
    %s150 = sphi 0, %s147
    %s151 = sphi 0, %s150
    %s167 = sphi 0, %s151
  $region4: #{centernet_head.1} parent=0 // loop_header_branch
    %14 = sbr.rel (%p12) target = $region8
  $region5: #{centernet_head.1} parent=0 // loop_body
    %s16 = ssub.s32 %s11, 1
    %s17 = ssub.s32 %s11, 2
    %s24 = sadd.s32 1, %s19
    %p25 = scmp.ge.s32.totalorder %s24, 1
    %s26 = scalar_select %p25, 0, %s24
    %s27 = sadd.s32 1, %s18
    %s28 = scalar_select %p25, %s27, %s18
    %p29 = scmp.ge.s32.totalorder %s28, 2
    %s30 = scalar_select %p29, 0, %s28
    %s31 = ssub.s32 %s18, %s30
    %s32 = ssub.s32 %s19, %s26
    %s33 = sor.u32 %s31, %s32
    %p34 = scmp.eq.s32.totalorder %s33, 0
    %s36 = sadd.s32 %s35, 1
    %s37 = scalar_select %p34, %s35, %s36
    %p40 = pneg %p34
    %p41 = scmp.eq.s32.totalorder %s11, 1
    %p42 = por %p40, %p41
    %p43 = scmp.ne.s32.totalorder %s35, %s38
    %p44 = scmp.eq.s32.totalorder %s11, 0
    %p45 = por %p43, %p44
    %p46 = scmp.ne.s32.totalorder %s35, %s38
    %p47 = scmp.eq.s32.totalorder %s16, 1
    %p48 = por %p46, %p47
    %p49 = scmp.ne.s32.totalorder %s38, %s39
    %p50 = scmp.eq.s32.totalorder %s16, 0
    %p51 = por %p49, %p50
    %p52 = scmp.ne.s32.totalorder %s38, %s39
    %p53 = scmp.eq.s32.totalorder %s17, 1
    %p54 = por %p52, %p53
    %p56 = scmp.ne.s32.totalorder %s39, %s55
    %p57 = scmp.eq.s32.totalorder %s17, 0
    %p58 = por %p56, %p57
    %s60 = sadd.s32 %s59, 1
    %p63 = scmp.eq.s32.totalorder %s11, 1
    %p64 = scmp.ne.s32.totalorder %s59, %s61
    %p65 = scmp.eq.s32.totalorder %s11, 0
    %p66 = por %p64, %p65
    %p67 = scmp.ne.s32.totalorder %s59, %s61
    %p68 = scmp.eq.s32.totalorder %s16, 1
    %p69 = por %p67, %p68
    %p70 = scmp.ne.s32.totalorder %s61, %s62
    %p71 = scmp.eq.s32.totalorder %s16, 0
    %p72 = por %p70, %p71
    %p73 = scmp.ne.s32.totalorder %s61, %s62
    %p74 = scmp.eq.s32.totalorder %s17, 1
    %p75 = por %p73, %p74
    %p77 = scmp.ne.s32.totalorder %s62, %s76
    %p78 = scmp.eq.s32.totalorder %s17, 0
    %p79 = por %p77, %p78
    %s81 = sadd.s32 %s80, 1
    %p84 = scmp.eq.s32.totalorder %s11, 1
    %p85 = scmp.ne.s32.totalorder %s80, %s82
    %p86 = scmp.eq.s32.totalorder %s11, 0
    %p87 = por %p85, %p86
    %p88 = scmp.ne.s32.totalorder %s80, %s82
    %p89 = scmp.eq.s32.totalorder %s16, 1
    %p90 = por %p88, %p89
    %p91 = scmp.ne.s32.totalorder %s82, %s83
    %p92 = scmp.eq.s32.totalorder %s16, 0
    %p93 = por %p91, %p92
    %p94 = scmp.ne.s32.totalorder %s82, %s83
    %p95 = scmp.eq.s32.totalorder %s17, 1
    %p96 = por %p94, %p95
    %p98 = scmp.ne.s32.totalorder %s83, %s97
    %p99 = scmp.eq.s32.totalorder %s17, 0
    %p100 = por %p98, %p99
    %s102 = sadd.s32 %s101, 1
    %p105 = scmp.eq.s32.totalorder %s11, 1
    %p106 = scmp.ne.s32.totalorder %s101, %s103
    %p107 = scmp.eq.s32.totalorder %s11, 0
    %p108 = por %p106, %p107
    %p109 = scmp.ne.s32.totalorder %s101, %s103
    %p110 = scmp.eq.s32.totalorder %s16, 1
    %p111 = por %p109, %p110
    %p112 = scmp.ne.s32.totalorder %s103, %s104
    %p113 = scmp.eq.s32.totalorder %s16, 0
    %p114 = por %p112, %p113
    %p115 = scmp.ne.s32.totalorder %s103, %s104
    %p116 = scmp.eq.s32.totalorder %s17, 1
    %p117 = por %p115, %p116
    %p119 = scmp.ne.s32.totalorder %s104, %s118
    %p120 = scmp.eq.s32.totalorder %s17, 0
    %p121 = por %p119, %p120
    %s123 = sadd.s32 %s122, 1
    %p126 = scmp.eq.s32.totalorder %s11, 1
    %p127 = scmp.ne.s32.totalorder %s122, %s124
    %p128 = scmp.eq.s32.totalorder %s11, 0
    %p129 = por %p127, %p128
    %p130 = scmp.ne.s32.totalorder %s122, %s124
    %p131 = scmp.eq.s32.totalorder %s16, 1
    %p132 = por %p130, %p131
    %p133 = scmp.ne.s32.totalorder %s124, %s125
    %p134 = scmp.eq.s32.totalorder %s16, 0
    %p135 = por %p133, %p134
    %p136 = scmp.ne.s32.totalorder %s124, %s125
    %p137 = scmp.eq.s32.totalorder %s17, 1
    %p138 = por %p136, %p137
    %p140 = scmp.ne.s32.totalorder %s125, %s139
    %p141 = scmp.eq.s32.totalorder %s17, 0
    %p142 = por %p140, %p141
    %s143 = ssub.s32 %s18, %s30
    %s144 = ssub.s32 %s19, %s26
    %s145 = sor.u32 %s143, %s144
    %p146 = scmp.eq.s32.totalorder %s145, 0
    %s148 = sadd.s32 %s147, 1
    %s149 = scalar_select %p146, %s147, %s148
    %p152 = pneg %p146
    %p153 = scmp.eq.s32.totalorder %s11, 1
    %p154 = por %p152, %p153
    %p155 = scmp.ne.s32.totalorder %s147, %s150
    %p156 = scmp.eq.s32.totalorder %s11, 0
    %p157 = por %p155, %p156
    %p158 = scmp.ne.s32.totalorder %s147, %s150
    %p159 = scmp.eq.s32.totalorder %s16, 1
    %p160 = por %p158, %p159
    %p161 = scmp.ne.s32.totalorder %s150, %s151
    %p162 = scmp.eq.s32.totalorder %s16, 0
    %p163 = por %p161, %p162
    %p164 = scmp.ne.s32.totalorder %s150, %s151
    %p165 = scmp.eq.s32.totalorder %s17, 1
    %p166 = por %p164, %p165
    %p168 = scmp.ne.s32.totalorder %s151, %s167
    %p169 = scmp.eq.s32.totalorder %s17, 0
    %p170 = por %p168, %p169
    %p171 = scmp.le.s32.totalorder 1, %s11
    %p172 = scmp.lt.s32.totalorder %s11, 3
    %p173 = pnand %p171, %p172
    %p174 = pneg %p173
    // Predicated region
    $region9: #{centernet_head.1} parent=5 // pred_check
      _
    $region10: #{centernet_head.1} parent=5 // pred_check_branch
      %176 = sbr.rel (%p173) target = $region12
    $region11: #{centernet_head.1} parent=5 // pred_region
      %s177 = ssub.s32 %s11, 1
      // Predicated region
      $region13: #{centernet_head.1} parent=11 // pred_check
        %p178 = pneg %p72
      $region14: #{centernet_head.1} parent=11 // pred_check_branch
        %180 = sbr.rel (%p178) target = $region16
      $region15: #{centernet_head.1} parent=11 // pred_region
        _
      $region16: #{centernet_head.1} parent=11 // pred_fallthru
        _
      // Predicated region
      $region17: #{centernet_head.1} parent=11 // pred_check
        %p181 = pneg %p93
      $region18: #{centernet_head.1} parent=11 // pred_check_branch
        %183 = sbr.rel (%p181) target = $region20
      $region19: #{centernet_head.1} parent=11 // pred_region
        _
      $region20: #{centernet_head.1} parent=11 // pred_fallthru
        _
      // Predicated region
      $region21: #{centernet_head.1} parent=11 // pred_check
        %p184 = pneg %p114
      $region22: #{centernet_head.1} parent=11 // pred_check_branch
        %186 = sbr.rel (%p184) target = $region24
      $region23: #{centernet_head.1} parent=11 // pred_region
        _
      $region24: #{centernet_head.1} parent=11 // pred_fallthru
        _
      // Predicated region
      $region25: #{centernet_head.1} parent=11 // pred_check
        %p187 = pneg %p135
      $region26: #{centernet_head.1} parent=11 // pred_check_branch
        %189 = sbr.rel (%p187) target = $region28
      $region27: #{centernet_head.1} parent=11 // pred_region
        _
      $region28: #{centernet_head.1} parent=11 // pred_fallthru
        _
    $region12: #{centernet_head.1} parent=5 // pred_fallthru
      _
    %p190 = scmp.lt.s32.totalorder %s11, 2
    // Predicated region
    $region29: #{centernet_head.1} parent=5 // pred_check
      %p191 = pneg %p190
    $region30: #{centernet_head.1} parent=5 // pred_check_branch
      %193 = sbr.rel (%p191) target = $region32
    $region31: #{centernet_head.1} parent=5 // pred_region
      // Predicated region
      $region33: #{centernet_head.1} parent=31 // pred_check
        %p194 = pneg %p45
      $region34: #{centernet_head.1} parent=31 // pred_check_branch
        %196 = sbr.rel (%p194) target = $region36
      $region35: #{centernet_head.1} parent=31 // pred_region
        %s197 = smul.u32 2, %s19
        %p198 = scmp.lt.s32.totalorder %s18, 1
        %s199 = scalar_select %p198, %s18, 1
        %p200 = scmp.lt.s32.totalorder %s197, 1
        %s201 = scalar_select %p200, %s197, 1
        %s202 = smul.addr %s199, 10
        %s203 = sadd.s32 %s201, %s202
        %s204 = smul.addr %s203, 8
        %s205 = scalar_lea.vmem %s0, %s204
        %s206 = smul.u32 2, %s19
      $region36: #{centernet_head.1} parent=31 // pred_fallthru
        _
    $region32: #{centernet_head.1} parent=5 // pred_fallthru
      _
    %p207 = scmp.le.s32.totalorder 1, %s11
    %p208 = scmp.lt.s32.totalorder %s11, 3
    %p209 = pnand %p207, %p208
    %p210 = pneg %p209
    // Predicated region
    $region37: #{centernet_head.1} parent=5 // pred_check
      _
    $region38: #{centernet_head.1} parent=5 // pred_check_branch
      %212 = sbr.rel (%p209) target = $region40
    $region39: #{centernet_head.1} parent=5 // pred_region
      %s213 = ssub.s32 %s11, 1
      %s214 = smul.u32 2, %s21
      %p215 = scmp.lt.s32.totalorder %s20, 1
      %s216 = scalar_select %p215, %s20, 1
      %p217 = scmp.lt.s32.totalorder %s214, 1
      %s218 = scalar_select %p217, %s214, 1
      %s219 = smul.addr %s216, 10
      %s220 = sadd.s32 %s218, %s219
      %s221 = smul.addr %s220, 8
      %s222 = scalar_lea.vmem %s0, %s221
      %p223 = pneg %p51
      %p224 = pneg %p48
      %p225 = pneg %p72
      %p226 = pneg %p69
      %p227 = pneg %p93
      %p228 = pneg %p90
      %p229 = pneg %p114
      %p230 = pneg %p111
      %p231 = pneg %p135
      %p232 = pneg %p132
      %p233 = pneg %p163
      %p234 = pneg %p160
      %s235 = smul.u32 2, %s21
      %p236 = scmp.lt.s32.totalorder %s20, 1
      %s237 = scalar_select %p236, %s20, 1
      %p238 = scmp.lt.s32.totalorder %s235, 1
      %s239 = scalar_select %p238, %s235, 1
      %s240 = smul.addr %s237, 2
      %s241 = sadd.s32 %s239, %s240
      %s242 = smul.addr %s241, 8
      %s243 = scalar_lea.vmem %s5, %s242
      %s244 = smul.u32 2, %s21
      %p245 = scmp.lt.s32.totalorder %s20, 1
      %s246 = scalar_select %p245, %s20, 1
      %p247 = scmp.lt.s32.totalorder %s244, 1
      %s248 = scalar_select %p247, %s244, 1
      %s249 = smul.addr %s246, 10
      %s250 = sadd.s32 %s248, %s249
      %s251 = smul.addr %s250, 8
      %s252 = scalar_lea.vmem %s0, %s251
      %s253 = smul.u32 2, %s21
      %s254 = smul.u32 2, %s21
      %p255 = scmp.lt.s32.totalorder %s20, 1
      %s256 = scalar_select %p255, %s20, 1
      %p257 = scmp.lt.s32.totalorder %s254, 1
      %s258 = scalar_select %p257, %s254, 1
      %s259 = smul.addr %s256, 2
      %s260 = sadd.s32 %s258, %s259
      %s261 = smul.addr %s260, 8
      %s262 = scalar_lea.vmem %s5, %s261
      %s263 = smul.u32 2, %s21
      %v264 = vld [vmem:[%s252] sm:$0xff]
      %v265 = vld [vmem:[%s252 + $0x8] sm:$0xff]
      %v266 = vld [vmem:[%s252 + $0x10] sm:$0xff]
      %v267 = vld [vmem:[%s252 + $0x18] sm:$0xff]
      %v268 = vld [vmem:[%s252 + $0x20] sm:$0xff]
      %v269 = vld [vmem:[%s252 + $0x28] sm:$0xff]
      %v270 = vld [vmem:[%s252 + $0x30] sm:$0xff]
      %v271 = vld [vmem:[%s252 + $0x38] sm:$0xff]
      %v272 = vld [vmem:[%s252 + $0x40] sm:$0xf]
      %v273 = vld [vmem:[%s252 + $0x48] sm:$0xf]
      %v274 = vld [vmem:[%s1] sm:$0xff]
      %v275 = vld [vmem:[%s1 + $0x8] sm:$0xff]
      %v276 = vld [vmem:[%s1 + $0x10] sm:$0xff]
      %v277 = vld [vmem:[%s1 + $0x18] sm:$0xff]
      %v278 = vld [vmem:[%s2] sm:$0xff]
      %v279 = vld [vmem:[%s2 + $0x8] sm:$0xff]
      %v280 = vld [vmem:[%s2 + $0x10] sm:$0xff]
      %v281 = vld [vmem:[%s2 + $0x18] sm:$0xff]
      %283 = vset.pattern.permute.xlu0 0
      %284 = vperm.xlu0 %283, %v278
      %v285 = vpop.permute.xlu0 %284
      %288 = vset.pattern.permute.xlu0 0
      %289 = vperm.xlu0 %288, %v279
      %v290 = vpop.permute.xlu0 %289
      %293 = vset.pattern.permute.xlu0 0
      %294 = vperm.xlu0 %293, %v280
      %v295 = vpop.permute.xlu0 %294
      %298 = vset.pattern.permute.xlu0 0
      %299 = vperm.xlu0 %298, %v281
      %v300 = vpop.permute.xlu0 %299
      %vm302 = vcmask 293888
      %v304 = vsel %vm302, %v274, 0
      %v307 = vsel %vm302, %v275, 0
      %v310 = vsel %vm302, %v276, 0
      %v313 = vsel %vm302, %v277, 0
      %vm315 = vcmask 1043456
      %v317 = vsel %vm315, %v272, 0
      %v320 = vsel %vm315, %v273, 0
      %322 = vmatprep.subr.mxu0 %v265
      %323 = vmatpush1.msra.mxu0 %v264
      %324 = vmatprep.subr.mxu0 %v267
      %325 = vmatpush1.msra.mxu0 %v266
      %326 = vmatprep.subr.mxu0 %v269
      %327 = vmatpush1.msra.mxu0 %v268
      %328 = vmatprep.subr.mxu0 %v271
      %329 = vmatpush1.msra.mxu0 %v270
      %330 = vmatprep.subr.mxu0 %v320
      %331 = vmatpush1.msra.mxu0 %v317
      %332 = vmatprep.subr.mxu0 0.0
      %333 = vmatpush1.msra.mxu0 0.0
      %334 = vmatprep.subr.mxu0 0.0
      %335 = vmatpush1.msra.mxu0 0.0
      %336 = vmatprep.subr.mxu0 0.0
      %337 = vmatpush1.msra.mxu0 0.0
      %338 = vmatprep.subr.mxu0 0.0
      %339 = vmatpush1.msra.mxu0 0.0
      %340 = vmatprep.subr.mxu0 0.0
      %341 = vmatpush1.msra.mxu0 0.0
      %342 = vmatprep.subr.mxu0 0.0
      %343 = vmatpush1.msra.mxu0 0.0
      %344 = vmatprep.subr.mxu0 0.0
      %345 = vmatpush1.msra.mxu0 0.0
      %346 = vmatprep.subr.mxu0 0.0
      %347 = vmatpush1.msra.mxu0 0.0
      %348 = vmatprep.subr.mxu0 0.0
      %349 = vmatpush1.msra.mxu0 0.0
      %350 = vmatprep.subr.mxu0 0.0
      %351 = vmatpush1.msra.mxu0 0.0
      %352 = vmatprep.subr.mxu0 0.0
      %353 = vmatpush1.msra.mxu0 0.0
      %354 = vmatprep.subr.mxu0 0.0
      %355 = vmatpush1.msra.mxu0 0.0
      %356 = vmatprep.subr.mxu0 0.0
      %357 = vmatpush1.msra.mxu0 0.0
      %358 = vmatprep.subr.mxu0 0.0
      %359 = vmatpush1.msra.mxu0 0.0
      %360 = vmatprep.subr.mxu0 0.0
      %361 = vmatpush1.msra.mxu0 0.0
      %362 = vmatprep.subr.mxu0 0.0
      %363 = vmatpush1.msra.mxu0 0.0
      %364 = vmatprep.subr.mxu0 0.0
      %365 = vmatpush1.msra.mxu0 0.0
      %366 = vmatprep.subr.mxu0 0.0
      %367 = vmatpush1.msra.mxu0 0.0
      %368 = vmatprep.subr.mxu0 0.0
      %369 = vmatpush1.msra.mxu0 0.0
      %370 = vmatprep.subr.mxu0 0.0
      %371 = vmatpush1.msra.mxu0 0.0
      %372 = vmatprep.subr.mxu0 0.0
      %373 = vmatpush1.msra.mxu0 0.0
      %374 = vmatprep.subr.mxu0 0.0
      %375 = vmatpush1.msra.mxu0 0.0
      %376 = vmatprep.subr.mxu0 0.0
      %377 = vmatpush1.msra.mxu0 0.0
      %378 = vmatprep.subr.mxu0 0.0
      %379 = vmatpush1.msra.mxu0 0.0
      %380 = vmatprep.subr.mxu0 0.0
      %381 = vmatpush1.msra.mxu0 0.0
      %382 = vmatprep.subr.mxu0 0.0
      %383 = vmatpush1.msra.mxu0 0.0
      %384 = vmatprep.subr.mxu0 0.0
      %385 = vmatpush1.msra.mxu0 0.0
      %386 = vmatprep.mubr.f32.mxu0 0.0
      %387 = vmatmul.mubr.f32.gmra.mrb[0].mxu0 %v304
      %v388 = vpop.f32.mrb[0].mxu0
      %v389 = vadd.f32 %v285, %v388
      %v390 = vpop.f32.mrb[0].mxu0
      %v391 = vadd.f32 %v285, %v390
      %392 = vmatprep.mubr.f32.mxu0 0.0
      %393 = vmatmul.mubr.f32.gmra.mrb[0].mxu0 %v307
      %v394 = vpop.f32.mrb[0].mxu0
      %v395 = vadd.f32 %v290, %v394
      %v396 = vpop.f32.mrb[0].mxu0
      %v397 = vadd.f32 %v290, %v396
      %398 = vmatprep.mubr.f32.mxu0 0.0
      %399 = vmatmul.mubr.f32.gmra.mrb[0].mxu0 %v310
      %v400 = vpop.f32.mrb[0].mxu0
      %v401 = vadd.f32 %v295, %v400
      %v402 = vpop.f32.mrb[0].mxu0
      %v403 = vadd.f32 %v295, %v402
      %404 = vmatprep.mubr.f32.mxu0 0.0
      %405 = vmatmul.mubr.f32.gmra.mrb[0].mxu0 %v313
      %v406 = vpop.f32.mrb[0].mxu0
      %v407 = vadd.f32 %v300, %v406
      %v408 = vpop.f32.mrb[0].mxu0
      %v409 = vadd.f32 %v300, %v408
      %410 = vdwg.mxu0
      %v411 = vmax.f32 %v389, 0.0
      %v412 = vmax.f32 %v391, 0.0
      %v413 = vmax.f32 %v395, 0.0
      %v414 = vmax.f32 %v397, 0.0
      %v415 = vmax.f32 %v401, 0.0
      %v416 = vmax.f32 %v403, 0.0
      %v417 = vmax.f32 %v407, 0.0
      %v418 = vmax.f32 %v409, 0.0
      %v419 = vld [vmem:[%s3] sm:$0xff]
      %v420 = vld [vmem:[%s4] sm:$0xff]
      %422 = vset.pattern.permute.xlu0 0
      %423 = vperm.xlu0 %422, %v420
      %v424 = vpop.permute.xlu0 %423
      %vm426 = vcmask 261120
      %v428 = vsel %vm426, %v419, 0
      %430 = vmatprep.subr.mxu0 %v412
      %431 = vmatpush1.msra.mxu0 %v411
      %432 = vmatprep.subr.mxu0 %v414
      %433 = vmatpush1.msra.mxu0 %v413
      %434 = vmatprep.subr.mxu0 %v416
      %435 = vmatpush1.msra.mxu0 %v415
      %436 = vmatprep.subr.mxu0 %v418
      %437 = vmatpush1.msra.mxu0 %v417
      %438 = vmatprep.subr.mxu0 0.0
      %439 = vmatpush1.msra.mxu0 0.0
      %440 = vmatprep.subr.mxu0 0.0
      %441 = vmatpush1.msra.mxu0 0.0
      %442 = vmatprep.subr.mxu0 0.0
      %443 = vmatpush1.msra.mxu0 0.0
      %444 = vmatprep.subr.mxu0 0.0
      %445 = vmatpush1.msra.mxu0 0.0
      %446 = vmatprep.subr.mxu0 0.0
      %447 = vmatpush1.msra.mxu0 0.0
      %448 = vmatprep.subr.mxu0 0.0
      %449 = vmatpush1.msra.mxu0 0.0
      %450 = vmatprep.subr.mxu0 0.0
      %451 = vmatpush1.msra.mxu0 0.0
      %452 = vmatprep.subr.mxu0 0.0
      %453 = vmatpush1.msra.mxu0 0.0
      %454 = vmatprep.subr.mxu0 0.0
      %455 = vmatpush1.msra.mxu0 0.0
      %456 = vmatprep.subr.mxu0 0.0
      %457 = vmatpush1.msra.mxu0 0.0
      %458 = vmatprep.subr.mxu0 0.0
      %459 = vmatpush1.msra.mxu0 0.0
      %460 = vmatprep.subr.mxu0 0.0
      %461 = vmatpush1.msra.mxu0 0.0
      %462 = vmatprep.subr.mxu0 0.0
      %463 = vmatpush1.msra.mxu0 0.0
      %464 = vmatprep.subr.mxu0 0.0
      %465 = vmatpush1.msra.mxu0 0.0
      %466 = vmatprep.subr.mxu0 0.0
      %467 = vmatpush1.msra.mxu0 0.0
      %468 = vmatprep.subr.mxu0 0.0
      %469 = vmatpush1.msra.mxu0 0.0
      %470 = vmatprep.subr.mxu0 0.0
      %471 = vmatpush1.msra.mxu0 0.0
      %472 = vmatprep.subr.mxu0 0.0
      %473 = vmatpush1.msra.mxu0 0.0
      %474 = vmatprep.subr.mxu0 0.0
      %475 = vmatpush1.msra.mxu0 0.0
      %476 = vmatprep.subr.mxu0 0.0
      %477 = vmatpush1.msra.mxu0 0.0
      %478 = vmatprep.subr.mxu0 0.0
      %479 = vmatpush1.msra.mxu0 0.0
      %480 = vmatprep.subr.mxu0 0.0
      %481 = vmatpush1.msra.mxu0 0.0
      %482 = vmatprep.subr.mxu0 0.0
      %483 = vmatpush1.msra.mxu0 0.0
      %484 = vmatprep.subr.mxu0 0.0
      %485 = vmatpush1.msra.mxu0 0.0
      %486 = vmatprep.subr.mxu0 0.0
      %487 = vmatpush1.msra.mxu0 0.0
      %488 = vmatprep.subr.mxu0 0.0
      %489 = vmatpush1.msra.mxu0 0.0
      %490 = vmatprep.subr.mxu0 0.0
      %491 = vmatpush1.msra.mxu0 0.0
      %492 = vmatprep.subr.mxu0 0.0
      %493 = vmatpush1.msra.mxu0 0.0
      %494 = vmatprep.mubr.f32.mxu0 0.0
      %495 = vmatmul.mubr.f32.gmra.mrb[0].mxu0 %v428
      %v496 = vpop.f32.mrb[0].mxu0
      %v497 = vadd.f32 %v424, %v496
      %v498 = vpop.f32.mrb[0].mxu0
      %v499 = vadd.f32 %v424, %v498
      %500 = vdwg.mxu0
      %501 = vst [vmem:[%s262] sm:$0xff] %v497
      %502 = vst [vmem:[%s262 + $0x8] sm:$0xff] %v499
      %s503 = smul.u32 2, %s21
      %p504 = scmp.lt.s32.totalorder %s20, 1
      %s505 = scalar_select %p504, %s20, 1
      %p506 = scmp.lt.s32.totalorder %s503, 1
      %s507 = scalar_select %p506, %s503, 1
      %s508 = smul.addr %s505, 2
      %s509 = sadd.s32 %s507, %s508
      %s510 = smul.addr %s509, 8
      %s511 = scalar_lea.vmem %s5, %s510
      // Predicated region
      $region41: #{centernet_head.1} parent=39 // pred_check
        %p512 = pneg %p160
      $region42: #{centernet_head.1} parent=39 // pred_check_branch
        %514 = sbr.rel (%p512) target = $region44
      $region43: #{centernet_head.1} parent=39 // pred_region
        %s515 = smul.u32 2, %s21
      $region44: #{centernet_head.1} parent=39 // pred_fallthru
        _
    $region40: #{centernet_head.1} parent=5 // pred_fallthru
      _
    %p516 = scmp.le.s32.totalorder 2, %s11
    // Predicated region
    $region45: #{centernet_head.1} parent=5 // pred_check
      %p517 = pneg %p516
    $region46: #{centernet_head.1} parent=5 // pred_check_branch
      %519 = sbr.rel (%p517) target = $region48
    $region47: #{centernet_head.1} parent=5 // pred_region
      %s520 = ssub.s32 %s11, 2
      // Predicated region
      $region49: #{centernet_head.1} parent=47 // pred_check
        %p521 = pneg %p166
      $region50: #{centernet_head.1} parent=47 // pred_check_branch
        %523 = sbr.rel (%p521) target = $region52
      $region51: #{centernet_head.1} parent=47 // pred_region
        %s524 = smul.u32 2, %s23
        %p525 = scmp.lt.s32.totalorder %s22, 1
        %s526 = scalar_select %p525, %s22, 1
        %p527 = scmp.lt.s32.totalorder %s524, 1
        %s528 = scalar_select %p527, %s524, 1
        %s529 = smul.addr %s526, 2
        %s530 = sadd.s32 %s528, %s529
        %s531 = smul.addr %s530, 8
        %s532 = scalar_lea.vmem %s5, %s531
      $region52: #{centernet_head.1} parent=47 // pred_fallthru
        _
    $region48: #{centernet_head.1} parent=5 // pred_fallthru
      _
  $region6: #{centernet_head.1} parent=0 // loop_footer
    %s15 = sadd.s32 1, %s11
  $region7: #{centernet_head.1} parent=0 // loop_footer_branch
    %10 = sbr.rel target = $region3
  $region8: #{centernet_head.1} parent=0 // loop_exit
    _

// kernel: centernet_head.1
$region0: #{centernet_head.1}
  #allocation0 [shape = 'u32[]', space=smem, size = 0x4, offset = 0x4, fixed_abs, tag = 'smem constant byte address 0x4 - core index']
  #allocation1 [shape = 'u32[144,128]{1,0:T(1,128)}', space=vmem, size = 0x12000, scoped, tag = 'internal scratch']
  %s0 = inlined_call_operand.vmem [shape: f32[2,36,256], index: 0, kind: input, shape index: {}]
  %s1 = inlined_call_operand.vmem [shape: f32[32,36], index: 1, kind: input, shape index: {}]
  %s2 = inlined_call_operand.vmem [shape: f32[32,1], index: 2, kind: input, shape index: {}]
  %s3 = inlined_call_operand.vmem [shape: f32[8,32], index: 3, kind: input, shape index: {}]
  %s4 = inlined_call_operand.vmem [shape: f32[8,1], index: 4, kind: input, shape index: {}]
  %s5 = inlined_call_operand.vmem [shape: f32[2,8,256], index: 5, kind: output, shape index: {}]
  %s6 = sld [smem:[#allocation0]]
  $region53: #{centernet_head.1} parent=0
    _
  %s8 = ssub.s32 1, %s6
  %s9 = scalar_select 0, %s8, %s6
  loop: start=0, step=1, limit=4
  $region2: #{centernet_head.1} parent=0 // loop_pre_header
    _
  $region3: #{centernet_head.1} parent=0 // loop_header
    %s11 = sphi 0, %s15
    %p12 = scmp.ge.s32.totalorder %s11, 4
    %s18 = sphi 0, %s30
    %s19 = sphi 0, %s26
    %s20 = sphi 0, %s18
    %s21 = sphi 0, %s19
    %s22 = sphi 0, %s20
    %s23 = sphi 0, %s21
    %s35 = sphi 0, %s37
    %s38 = sphi 0, %s35
    %s39 = sphi 0, %s38
    %s55 = sphi 0, %s39
    %s59 = sphi 0, %s59
    %s61 = sphi 0, %s59
    %s62 = sphi 0, %s61
    %s76 = sphi 0, %s62
    %s80 = sphi 0, %s80
    %s82 = sphi 0, %s80
    %s83 = sphi 0, %s82
    %s97 = sphi 0, %s83
    %s101 = sphi 0, %s101
    %s103 = sphi 0, %s101
    %s104 = sphi 0, %s103
    %s118 = sphi 0, %s104
    %s122 = sphi 0, %s122
    %s124 = sphi 0, %s122
    %s125 = sphi 0, %s124
    %s139 = sphi 0, %s125
    %s147 = sphi 0, %s149
    %s150 = sphi 0, %s147
    %s151 = sphi 0, %s150
    %s167 = sphi 0, %s151
  $region4: #{centernet_head.1} parent=0 // loop_header_branch
    %14 = sbr.rel (%p12) target = $region8
  $region5: #{centernet_head.1} parent=0 // loop_body
    %s16 = ssub.s32 %s11, 1
    %s17 = ssub.s32 %s11, 2
    %s24 = sadd.s32 1, %s19
    %p25 = scmp.ge.s32.totalorder %s24, 1
    %s26 = scalar_select %p25, 0, %s24
    %s27 = sadd.s32 1, %s18
    %s28 = scalar_select %p25, %s27, %s18
    %p29 = scmp.ge.s32.totalorder %s28, 2
    %s30 = scalar_select %p29, 0, %s28
    %s31 = ssub.s32 %s18, %s30
    %s32 = ssub.s32 %s19, %s26
    %s33 = sor.u32 %s31, %s32
    %p34 = scmp.eq.s32.totalorder %s33, 0
    %s36 = sadd.s32 %s35, 1
    %s37 = scalar_select %p34, %s35, %s36
    %p40 = pneg %p34
    %p41 = scmp.eq.s32.totalorder %s11, 1
    %p42 = por %p40, %p41
    %p43 = scmp.ne.s32.totalorder %s35, %s38
    %p44 = scmp.eq.s32.totalorder %s11, 0
    %p45 = por %p43, %p44
    %p46 = scmp.ne.s32.totalorder %s35, %s38
    %p47 = scmp.eq.s32.totalorder %s16, 1
    %p48 = por %p46, %p47
    %p49 = scmp.ne.s32.totalorder %s38, %s39
    %p50 = scmp.eq.s32.totalorder %s16, 0
    %p51 = por %p49, %p50
    %p52 = scmp.ne.s32.totalorder %s38, %s39
    %p53 = scmp.eq.s32.totalorder %s17, 1
    %p54 = por %p52, %p53
    %p56 = scmp.ne.s32.totalorder %s39, %s55
    %p57 = scmp.eq.s32.totalorder %s17, 0
    %p58 = por %p56, %p57
    %s60 = sadd.s32 %s59, 1
    %p63 = scmp.eq.s32.totalorder %s11, 1
    %p64 = scmp.ne.s32.totalorder %s59, %s61
    %p65 = scmp.eq.s32.totalorder %s11, 0
    %p66 = por %p64, %p65
    %p67 = scmp.ne.s32.totalorder %s59, %s61
    %p68 = scmp.eq.s32.totalorder %s16, 1
    %p69 = por %p67, %p68
    %p70 = scmp.ne.s32.totalorder %s61, %s62
    %p71 = scmp.eq.s32.totalorder %s16, 0
    %p72 = por %p70, %p71
    %p73 = scmp.ne.s32.totalorder %s61, %s62
    %p74 = scmp.eq.s32.totalorder %s17, 1
    %p75 = por %p73, %p74
    %p77 = scmp.ne.s32.totalorder %s62, %s76
    %p78 = scmp.eq.s32.totalorder %s17, 0
    %p79 = por %p77, %p78
    %s81 = sadd.s32 %s80, 1
    %p84 = scmp.eq.s32.totalorder %s11, 1
    %p85 = scmp.ne.s32.totalorder %s80, %s82
    %p86 = scmp.eq.s32.totalorder %s11, 0
    %p87 = por %p85, %p86
    %p88 = scmp.ne.s32.totalorder %s80, %s82
    %p89 = scmp.eq.s32.totalorder %s16, 1
    %p90 = por %p88, %p89
    %p91 = scmp.ne.s32.totalorder %s82, %s83
    %p92 = scmp.eq.s32.totalorder %s16, 0
    %p93 = por %p91, %p92
    %p94 = scmp.ne.s32.totalorder %s82, %s83
    %p95 = scmp.eq.s32.totalorder %s17, 1
    %p96 = por %p94, %p95
    %p98 = scmp.ne.s32.totalorder %s83, %s97
    %p99 = scmp.eq.s32.totalorder %s17, 0
    %p100 = por %p98, %p99
    %s102 = sadd.s32 %s101, 1
    %p105 = scmp.eq.s32.totalorder %s11, 1
    %p106 = scmp.ne.s32.totalorder %s101, %s103
    %p107 = scmp.eq.s32.totalorder %s11, 0
    %p108 = por %p106, %p107
    %p109 = scmp.ne.s32.totalorder %s101, %s103
    %p110 = scmp.eq.s32.totalorder %s16, 1
    %p111 = por %p109, %p110
    %p112 = scmp.ne.s32.totalorder %s103, %s104
    %p113 = scmp.eq.s32.totalorder %s16, 0
    %p114 = por %p112, %p113
    %p115 = scmp.ne.s32.totalorder %s103, %s104
    %p116 = scmp.eq.s32.totalorder %s17, 1
    %p117 = por %p115, %p116
    %p119 = scmp.ne.s32.totalorder %s104, %s118
    %p120 = scmp.eq.s32.totalorder %s17, 0
    %p121 = por %p119, %p120
    %s123 = sadd.s32 %s122, 1
    %p126 = scmp.eq.s32.totalorder %s11, 1
    %p127 = scmp.ne.s32.totalorder %s122, %s124
    %p128 = scmp.eq.s32.totalorder %s11, 0
    %p129 = por %p127, %p128
    %p130 = scmp.ne.s32.totalorder %s122, %s124
    %p131 = scmp.eq.s32.totalorder %s16, 1
    %p132 = por %p130, %p131
    %p133 = scmp.ne.s32.totalorder %s124, %s125
    %p134 = scmp.eq.s32.totalorder %s16, 0
    %p135 = por %p133, %p134
    %p136 = scmp.ne.s32.totalorder %s124, %s125
    %p137 = scmp.eq.s32.totalorder %s17, 1
    %p138 = por %p136, %p137
    %p140 = scmp.ne.s32.totalorder %s125, %s139
    %p141 = scmp.eq.s32.totalorder %s17, 0
    %p142 = por %p140, %p141
    %s143 = ssub.s32 %s18, %s30
    %s144 = ssub.s32 %s19, %s26
    %s145 = sor.u32 %s143, %s144
    %p146 = scmp.eq.s32.totalorder %s145, 0
    %s148 = sadd.s32 %s147, 1
    %s149 = scalar_select %p146, %s147, %s148
    %p152 = pneg %p146
    %p153 = scmp.eq.s32.totalorder %s11, 1
    %p154 = por %p152, %p153
    %p155 = scmp.ne.s32.totalorder %s147, %s150
    %p156 = scmp.eq.s32.totalorder %s11, 0
    %p157 = por %p155, %p156
    %p158 = scmp.ne.s32.totalorder %s147, %s150
    %p159 = scmp.eq.s32.totalorder %s16, 1
    %p160 = por %p158, %p159
    %p161 = scmp.ne.s32.totalorder %s150, %s151
    %p162 = scmp.eq.s32.totalorder %s16, 0
    %p163 = por %p161, %p162
    %p164 = scmp.ne.s32.totalorder %s150, %s151
    %p165 = scmp.eq.s32.totalorder %s17, 1
    %p166 = por %p164, %p165
    %p168 = scmp.ne.s32.totalorder %s151, %s167
    %p169 = scmp.eq.s32.totalorder %s17, 0
    %p170 = por %p168, %p169
    %p171 = scmp.le.s32.totalorder 1, %s11
    %p172 = scmp.lt.s32.totalorder %s11, 3
    %p173 = pnand %p171, %p172
    %p174 = pneg %p173
    // Predicated region
    $region9: #{centernet_head.1} parent=5 // pred_check
      _
    $region10: #{centernet_head.1} parent=5 // pred_check_branch
      %176 = sbr.rel (%p173) target = $region12
    $region11: #{centernet_head.1} parent=5 // pred_region
      %s177 = ssub.s32 %s11, 1
      // Predicated region
      $region13: #{centernet_head.1} parent=11 // pred_check
        %p178 = pneg %p72
      $region14: #{centernet_head.1} parent=11 // pred_check_branch
        %180 = sbr.rel (%p178) target = $region16
      $region15: #{centernet_head.1} parent=11 // pred_region
        _
      $region16: #{centernet_head.1} parent=11 // pred_fallthru
        _
      // Predicated region
      $region17: #{centernet_head.1} parent=11 // pred_check
        %p181 = pneg %p93
      $region18: #{centernet_head.1} parent=11 // pred_check_branch
        %183 = sbr.rel (%p181) target = $region20
      $region19: #{centernet_head.1} parent=11 // pred_region
        _
      $region20: #{centernet_head.1} parent=11 // pred_fallthru
        _
      // Predicated region
      $region21: #{centernet_head.1} parent=11 // pred_check
        %p184 = pneg %p114
      $region22: #{centernet_head.1} parent=11 // pred_check_branch
        %186 = sbr.rel (%p184) target = $region24
      $region23: #{centernet_head.1} parent=11 // pred_region
        _
      $region24: #{centernet_head.1} parent=11 // pred_fallthru
        _
      // Predicated region
      $region25: #{centernet_head.1} parent=11 // pred_check
        %p187 = pneg %p135
      $region26: #{centernet_head.1} parent=11 // pred_check_branch
        %189 = sbr.rel (%p187) target = $region28
      $region27: #{centernet_head.1} parent=11 // pred_region
        _
      $region28: #{centernet_head.1} parent=11 // pred_fallthru
        _
    $region12: #{centernet_head.1} parent=5 // pred_fallthru
      _
    %p190 = scmp.lt.s32.totalorder %s11, 2
    // Predicated region
    $region29: #{centernet_head.1} parent=5 // pred_check
      %p191 = pneg %p190
    $region30: #{centernet_head.1} parent=5 // pred_check_branch
      %193 = sbr.rel (%p191) target = $region32
    $region31: #{centernet_head.1} parent=5 // pred_region
      // Predicated region
      $region33: #{centernet_head.1} parent=31 // pred_check
        %p194 = pneg %p45
      $region34: #{centernet_head.1} parent=31 // pred_check_branch
        %196 = sbr.rel (%p194) target = $region36
      $region35: #{centernet_head.1} parent=31 // pred_region
        %s197 = smul.u32 2, %s19
        %p198 = scmp.lt.s32.totalorder %s18, 1
        %s199 = scalar_select %p198, %s18, 1
        %p200 = scmp.lt.s32.totalorder %s197, 1
        %s201 = scalar_select %p200, %s197, 1
        %s202 = smul.addr %s199, 10
        %s203 = sadd.s32 %s201, %s202
        %s204 = smul.addr %s203, 8
        %s205 = scalar_lea.vmem %s0, %s204
        %s206 = smul.u32 2, %s19
      $region36: #{centernet_head.1} parent=31 // pred_fallthru
        _
    $region32: #{centernet_head.1} parent=5 // pred_fallthru
      _
    %p207 = scmp.le.s32.totalorder 1, %s11
    %p208 = scmp.lt.s32.totalorder %s11, 3
    %p209 = pnand %p207, %p208
    %p210 = pneg %p209
    // Predicated region
    $region37: #{centernet_head.1} parent=5 // pred_check
      _
    $region38: #{centernet_head.1} parent=5 // pred_check_branch
      %212 = sbr.rel (%p209) target = $region40
    $region39: #{centernet_head.1} parent=5 // pred_region
      %s213 = ssub.s32 %s11, 1
      %s214 = smul.u32 2, %s21
      %p215 = scmp.lt.s32.totalorder %s20, 1
      %s216 = scalar_select %p215, %s20, 1
      %p217 = scmp.lt.s32.totalorder %s214, 1
      %s218 = scalar_select %p217, %s214, 1
      %s219 = smul.addr %s216, 10
      %s220 = sadd.s32 %s218, %s219
      %s221 = smul.addr %s220, 8
      %s222 = scalar_lea.vmem %s0, %s221
      %p223 = pneg %p51
      %p224 = pneg %p48
      %p225 = pneg %p72
      %p226 = pneg %p69
      %p227 = pneg %p93
      %p228 = pneg %p90
      %p229 = pneg %p114
      %p230 = pneg %p111
      %p231 = pneg %p135
      %p232 = pneg %p132
      %p233 = pneg %p163
      %p234 = pneg %p160
      %s235 = smul.u32 2, %s21
      %p236 = scmp.lt.s32.totalorder %s20, 1
      %s237 = scalar_select %p236, %s20, 1
      %p238 = scmp.lt.s32.totalorder %s235, 1
      %s239 = scalar_select %p238, %s235, 1
      %s240 = smul.addr %s237, 2
      %s241 = sadd.s32 %s239, %s240
      %s242 = smul.addr %s241, 8
      %s243 = scalar_lea.vmem %s5, %s242
      %s244 = smul.u32 2, %s21
      %p245 = scmp.lt.s32.totalorder %s20, 1
      %s246 = scalar_select %p245, %s20, 1
      %p247 = scmp.lt.s32.totalorder %s244, 1
      %s248 = scalar_select %p247, %s244, 1
      %s249 = smul.addr %s246, 10
      %s250 = sadd.s32 %s248, %s249
      %s251 = smul.addr %s250, 8
      %s252 = scalar_lea.vmem %s0, %s251
      %s253 = smul.u32 2, %s21
      %s254 = smul.u32 2, %s21
      %p255 = scmp.lt.s32.totalorder %s20, 1
      %s256 = scalar_select %p255, %s20, 1
      %p257 = scmp.lt.s32.totalorder %s254, 1
      %s258 = scalar_select %p257, %s254, 1
      %s259 = smul.addr %s256, 2
      %s260 = sadd.s32 %s258, %s259
      %s261 = smul.addr %s260, 8
      %s262 = scalar_lea.vmem %s5, %s261
      %s263 = smul.u32 2, %s21
      %v264 = vld [vmem:[%s252] sm:$0xff]
      %v265 = vld [vmem:[%s252 + $0x8] sm:$0xff]
      %v266 = vld [vmem:[%s252 + $0x10] sm:$0xff]
      %v267 = vld [vmem:[%s252 + $0x18] sm:$0xff]
      %v268 = vld [vmem:[%s252 + $0x20] sm:$0xff]
      %v269 = vld [vmem:[%s252 + $0x28] sm:$0xff]
      %v270 = vld [vmem:[%s252 + $0x30] sm:$0xff]
      %v271 = vld [vmem:[%s252 + $0x38] sm:$0xff]
      %v272 = vld [vmem:[%s252 + $0x40] sm:$0xf]
      %v273 = vld [vmem:[%s252 + $0x48] sm:$0xf]
      %v274 = vld [vmem:[%s1] sm:$0xff]
      %v275 = vld [vmem:[%s1 + $0x8] sm:$0xff]
      %v276 = vld [vmem:[%s1 + $0x10] sm:$0xff]
      %v277 = vld [vmem:[%s1 + $0x18] sm:$0xff]
      %v278 = vld [vmem:[%s2] sm:$0xff]
      %v279 = vld [vmem:[%s2 + $0x8] sm:$0xff]
      %v280 = vld [vmem:[%s2 + $0x10] sm:$0xff]
      %v281 = vld [vmem:[%s2 + $0x18] sm:$0xff]
      %283 = vset.pattern.permute.xlu0 0
      %284 = vperm.xlu0 %283, %v278
      %v285 = vpop.permute.xlu0 %284
      %288 = vset.pattern.permute.xlu0 0
      %289 = vperm.xlu0 %288, %v279
      %v290 = vpop.permute.xlu0 %289
      %293 = vset.pattern.permute.xlu0 0
      %294 = vperm.xlu0 %293, %v280
      %v295 = vpop.permute.xlu0 %294
      %298 = vset.pattern.permute.xlu0 0
      %299 = vperm.xlu0 %298, %v281
      %v300 = vpop.permute.xlu0 %299
      %vm302 = vcmask 293888
      %v304 = vsel %vm302, %v274, 0
      %v307 = vsel %vm302, %v275, 0
      %v310 = vsel %vm302, %v276, 0
      %v313 = vsel %vm302, %v277, 0
      %vm315 = vcmask 1043456
      %v317 = vsel %vm315, %v272, 0
      %v320 = vsel %vm315, %v273, 0
      %322 = vmatprep.subr.mxu0 %v265
      %323 = vmatpush1.msra.mxu0 %v264
      %324 = vmatprep.subr.mxu0 %v267
      %325 = vmatpush1.msra.mxu0 %v266
      %326 = vmatprep.subr.mxu0 %v269
      %327 = vmatpush1.msra.mxu0 %v268
      %328 = vmatprep.subr.mxu0 %v271
      %329 = vmatpush1.msra.mxu0 %v270
      %330 = vmatprep.subr.mxu0 %v320
      %331 = vmatpush1.msra.mxu0 %v317
      %332 = vmatprep.subr.mxu0 0.0
      %333 = vmatpush1.msra.mxu0 0.0
      %334 = vmatprep.subr.mxu0 0.0
      %335 = vmatpush1.msra.mxu0 0.0
      %336 = vmatprep.subr.mxu0 0.0
      %337 = vmatpush1.msra.mxu0 0.0
      %338 = vmatprep.subr.mxu0 0.0
      %339 = vmatpush1.msra.mxu0 0.0
      %340 = vmatprep.subr.mxu0 0.0
      %341 = vmatpush1.msra.mxu0 0.0
      %342 = vmatprep.subr.mxu0 0.0
      %343 = vmatpush1.msra.mxu0 0.0
      %344 = vmatprep.subr.mxu0 0.0
      %345 = vmatpush1.msra.mxu0 0.0
      %346 = vmatprep.subr.mxu0 0.0
      %347 = vmatpush1.msra.mxu0 0.0
      %348 = vmatprep.subr.mxu0 0.0
      %349 = vmatpush1.msra.mxu0 0.0
      %350 = vmatprep.subr.mxu0 0.0
      %351 = vmatpush1.msra.mxu0 0.0
      %352 = vmatprep.subr.mxu0 0.0
      %353 = vmatpush1.msra.mxu0 0.0
      %354 = vmatprep.subr.mxu0 0.0
      %355 = vmatpush1.msra.mxu0 0.0
      %356 = vmatprep.subr.mxu0 0.0
      %357 = vmatpush1.msra.mxu0 0.0
      %358 = vmatprep.subr.mxu0 0.0
      %359 = vmatpush1.msra.mxu0 0.0
      %360 = vmatprep.subr.mxu0 0.0
      %361 = vmatpush1.msra.mxu0 0.0
      %362 = vmatprep.subr.mxu0 0.0
      %363 = vmatpush1.msra.mxu0 0.0
      %364 = vmatprep.subr.mxu0 0.0
      %365 = vmatpush1.msra.mxu0 0.0
      %366 = vmatprep.subr.mxu0 0.0
      %367 = vmatpush1.msra.mxu0 0.0
      %368 = vmatprep.subr.mxu0 0.0
      %369 = vmatpush1.msra.mxu0 0.0
      %370 = vmatprep.subr.mxu0 0.0
      %371 = vmatpush1.msra.mxu0 0.0
      %372 = vmatprep.subr.mxu0 0.0
      %373 = vmatpush1.msra.mxu0 0.0
      %374 = vmatprep.subr.mxu0 0.0
      %375 = vmatpush1.msra.mxu0 0.0
      %376 = vmatprep.subr.mxu0 0.0
      %377 = vmatpush1.msra.mxu0 0.0
      %378 = vmatprep.subr.mxu0 0.0
      %379 = vmatpush1.msra.mxu0 0.0
      %380 = vmatprep.subr.mxu0 0.0
      %381 = vmatpush1.msra.mxu0 0.0
      %382 = vmatprep.subr.mxu0 0.0
      %383 = vmatpush1.msra.mxu0 0.0
      %384 = vmatprep.subr.mxu0 0.0
      %385 = vmatpush1.msra.mxu0 0.0
      %386 = vmatprep.mubr.f32.mxu0 0.0
      %387 = vmatmul.mubr.f32.gmra.mrb[0].mxu0 %v304
      %v388 = vpop.f32.mrb[0].mxu0
      %v389 = vadd.f32 %v285, %v388
      %v390 = vpop.f32.mrb[0].mxu0
      %v391 = vadd.f32 %v285, %v390
      %392 = vmatprep.mubr.f32.mxu0 0.0
      %393 = vmatmul.mubr.f32.gmra.mrb[0].mxu0 %v307
      %v394 = vpop.f32.mrb[0].mxu0
      %v395 = vadd.f32 %v290, %v394
      %v396 = vpop.f32.mrb[0].mxu0
      %v397 = vadd.f32 %v290, %v396
      %398 = vmatprep.mubr.f32.mxu0 0.0
      %399 = vmatmul.mubr.f32.gmra.mrb[0].mxu0 %v310
      %v400 = vpop.f32.mrb[0].mxu0
      %v401 = vadd.f32 %v295, %v400
      %v402 = vpop.f32.mrb[0].mxu0
      %v403 = vadd.f32 %v295, %v402
      %404 = vmatprep.mubr.f32.mxu0 0.0
      %405 = vmatmul.mubr.f32.gmra.mrb[0].mxu0 %v313
      %v406 = vpop.f32.mrb[0].mxu0
      %v407 = vadd.f32 %v300, %v406
      %v408 = vpop.f32.mrb[0].mxu0
      %v409 = vadd.f32 %v300, %v408
      %410 = vdwg.mxu0
      %v411 = vmax.f32 %v389, 0.0
      %v412 = vmax.f32 %v391, 0.0
      %v413 = vmax.f32 %v395, 0.0
      %v414 = vmax.f32 %v397, 0.0
      %v415 = vmax.f32 %v401, 0.0
      %v416 = vmax.f32 %v403, 0.0
      %v417 = vmax.f32 %v407, 0.0
      %v418 = vmax.f32 %v409, 0.0
      %v419 = vld [vmem:[%s3] sm:$0xff]
      %v420 = vld [vmem:[%s4] sm:$0xff]
      %422 = vset.pattern.permute.xlu0 0
      %423 = vperm.xlu0 %422, %v420
      %v424 = vpop.permute.xlu0 %423
      %vm426 = vcmask 261120
      %v428 = vsel %vm426, %v419, 0
      %430 = vmatprep.subr.mxu0 %v412
      %431 = vmatpush1.msra.mxu0 %v411
      %432 = vmatprep.subr.mxu0 %v414
      %433 = vmatpush1.msra.mxu0 %v413
      %434 = vmatprep.subr.mxu0 %v416
      %435 = vmatpush1.msra.mxu0 %v415
      %436 = vmatprep.subr.mxu0 %v418
      %437 = vmatpush1.msra.mxu0 %v417
      %438 = vmatprep.subr.mxu0 0.0
      %439 = vmatpush1.msra.mxu0 0.0
      %440 = vmatprep.subr.mxu0 0.0
      %441 = vmatpush1.msra.mxu0 0.0
      %442 = vmatprep.subr.mxu0 0.0
      %443 = vmatpush1.msra.mxu0 0.0
      %444 = vmatprep.subr.mxu0 0.0
      %445 = vmatpush1.msra.mxu0 0.0
      %446 = vmatprep.subr.mxu0 0.0
      %447 = vmatpush1.msra.mxu0 0.0
      %448 = vmatprep.subr.mxu0 0.0
      %449 = vmatpush1.msra.mxu0 0.0
      %450 = vmatprep.subr.mxu0 0.0
      %451 = vmatpush1.msra.mxu0 0.0
      %452 = vmatprep.subr.mxu0 0.0
      %453 = vmatpush1.msra.mxu0 0.0
      %454 = vmatprep.subr.mxu0 0.0
      %455 = vmatpush1.msra.mxu0 0.0
      %456 = vmatprep.subr.mxu0 0.0
      %457 = vmatpush1.msra.mxu0 0.0
      %458 = vmatprep.subr.mxu0 0.0
      %459 = vmatpush1.msra.mxu0 0.0
      %460 = vmatprep.subr.mxu0 0.0
      %461 = vmatpush1.msra.mxu0 0.0
      %462 = vmatprep.subr.mxu0 0.0
      %463 = vmatpush1.msra.mxu0 0.0
      %464 = vmatprep.subr.mxu0 0.0
      %465 = vmatpush1.msra.mxu0 0.0
      %466 = vmatprep.subr.mxu0 0.0
      %467 = vmatpush1.msra.mxu0 0.0
      %468 = vmatprep.subr.mxu0 0.0
      %469 = vmatpush1.msra.mxu0 0.0
      %470 = vmatprep.subr.mxu0 0.0
      %471 = vmatpush1.msra.mxu0 0.0
      %472 = vmatprep.subr.mxu0 0.0
      %473 = vmatpush1.msra.mxu0 0.0
      %474 = vmatprep.subr.mxu0 0.0
      %475 = vmatpush1.msra.mxu0 0.0
      %476 = vmatprep.subr.mxu0 0.0
      %477 = vmatpush1.msra.mxu0 0.0
      %478 = vmatprep.subr.mxu0 0.0
      %479 = vmatpush1.msra.mxu0 0.0
      %480 = vmatprep.subr.mxu0 0.0
      %481 = vmatpush1.msra.mxu0 0.0
      %482 = vmatprep.subr.mxu0 0.0
      %483 = vmatpush1.msra.mxu0 0.0
      %484 = vmatprep.subr.mxu0 0.0
      %485 = vmatpush1.msra.mxu0 0.0
      %486 = vmatprep.subr.mxu0 0.0
      %487 = vmatpush1.msra.mxu0 0.0
      %488 = vmatprep.subr.mxu0 0.0
      %489 = vmatpush1.msra.mxu0 0.0
      %490 = vmatprep.subr.mxu0 0.0
      %491 = vmatpush1.msra.mxu0 0.0
      %492 = vmatprep.subr.mxu0 0.0
      %493 = vmatpush1.msra.mxu0 0.0
      %494 = vmatprep.mubr.f32.mxu0 0.0
      %495 = vmatmul.mubr.f32.gmra.mrb[0].mxu0 %v428
      %v496 = vpop.f32.mrb[0].mxu0
      %v497 = vadd.f32 %v424, %v496
      %v498 = vpop.f32.mrb[0].mxu0
      %v499 = vadd.f32 %v424, %v498
      %500 = vdwg.mxu0
      %501 = vst [vmem:[%s262] sm:$0xff] %v497
      %502 = vst [vmem:[%s262 + $0x8] sm:$0xff] %v499
      %s503 = smul.u32 2, %s21
      %p504 = scmp.lt.s32.totalorder %s20, 1
      %s505 = scalar_select %p504, %s20, 1
      %p506 = scmp.lt.s32.totalorder %s503, 1
      %s507 = scalar_select %p506, %s503, 1
      %s508 = smul.addr %s505, 2
      %s509 = sadd.s32 %s507, %s508
      %s510 = smul.addr %s509, 8
      %s511 = scalar_lea.vmem %s5, %s510
      // Predicated region
      $region41: #{centernet_head.1} parent=39 // pred_check
        %p512 = pneg %p160
      $region42: #{centernet_head.1} parent=39 // pred_check_branch
        %514 = sbr.rel (%p512) target = $region44
      $region43: #{centernet_head.1} parent=39 // pred_region
        %s515 = smul.u32 2, %s21
      $region44: #{centernet_head.1} parent=39 // pred_fallthru
        _
    $region40: #{centernet_head.1} parent=5 // pred_fallthru
      _
    %p516 = scmp.le.s32.totalorder 2, %s11
    // Predicated region
    $region45: #{centernet_head.1} parent=5 // pred_check
      %p517 = pneg %p516
    $region46: #{centernet_head.1} parent=5 // pred_check_branch
      %519 = sbr.rel (%p517) target = $region48
    $region47: #{centernet_head.1} parent=5 // pred_region
      %s520 = ssub.s32 %s11, 2
      // Predicated region
      $region49: #{centernet_head.1} parent=47 // pred_check
        %p521 = pneg %p166
      $region50: #{centernet_head.1} parent=47 // pred_check_branch
        %523 = sbr.rel (%p521) target = $region52
      $region51: #{centernet_head.1} parent=47 // pred_region
        %s524 = smul.u32 2, %s23
        %p525 = scmp.lt.s32.totalorder %s22, 1
        %s526 = scalar_select %p525, %s22, 1
        %p527 = scmp.lt.s32.totalorder %s524, 1
        %s528 = scalar_select %p527, %s524, 1
        %s529 = smul.addr %s526, 2
        %s530 = sadd.s32 %s528, %s529
        %s531 = smul.addr %s530, 8
        %s532 = scalar_lea.vmem %s5, %s531
      $region52: #{centernet_head.1} parent=47 // pred_fallthru
        _
    $region48: #{centernet_head.1} parent=5 // pred_fallthru
      _
  $region6: #{centernet_head.1} parent=0 // loop_footer
    %s15 = sadd.s32 1, %s11
  $region7: #{centernet_head.1} parent=0 // loop_footer_branch
    %10 = sbr.rel target = $region3
  $region8: #{centernet_head.1} parent=0 // loop_exit
    _

</llo_original>
